<compile_context>
chip_gen: v7x
topology: tpu7x:2x2x1
jax: 0.10.0
libtpu: 0.0.40
codegen_flags: <defaults>
</compile_context>

<pallas_src>
import jax
import jax.numpy as jnp
from jax.experimental import pallas as pl
from jax.experimental.pallas import tpu as pltpu

INPUT_DIM = 512
HIDDEN_DIMS = [256, 128]
OUT_DIM = 4


def _mlp_kernel(x_ref, w1_ref, b1_ref, w2_ref, b2_ref, w3_ref, b3_ref, o_ref):
    # Cast activations to bf16 in-register (x arrives as f32 straight from HBM).
    x_bf = x_ref[...].astype(jnp.bfloat16)
    # Layer 1: Linear(512 -> 256) + ReLU  (bf16 MXU matmul, f32 accumulate)
    h1 = jnp.dot(x_bf, w1_ref[...], preferred_element_type=jnp.float32)
    h1 = jnp.maximum(h1 + b1_ref[...], 0.0)
    # Layer 2: Linear(256 -> 128) + ReLU
    h2 = jnp.dot(h1.astype(jnp.bfloat16), w2_ref[...],
                 preferred_element_type=jnp.float32)
    h2 = jnp.maximum(h2 + b2_ref[...], 0.0)
    # Output head: Linear(128 -> 4), written narrow (block_b, 4) in f32.
    out = jnp.dot(h2.astype(jnp.bfloat16), w3_ref[...],
                  preferred_element_type=jnp.float32)
    o_ref[...] = (out + b3_ref[...]).astype(o_ref.dtype)


def _round_up(x, m):
    return ((x + m - 1) // m) * m


def _pick_block_b(B):
    # Small / medium batches: one tile covering the whole batch.  The block
    # equals the full array dims, so any B is layout-legal (no padding needed).
    if B <= 1024:
        return B
    # Large batches: aim for >= 4 grid steps (megacore sharding on v7x + keeps
    # the x DMA double-buffer busy), capped at 2048 rows (~12 MiB VMEM working
    # set -> safe on v7x's 64 MiB physical VMEM / 32 MiB scoped limit).
    return min(2048, _round_up((B + 3) // 4, 256))


@jax.jit
def nutrition_predictor_forward(x, w1, b1, w2, b2, w3, b3):
    """x: (B, 512) f32.  Weights (in_dim, out_dim), biases (1, out_dim), f32."""
    B, D = x.shape
    block_b = _pick_block_b(B)
    grid = (pl.cdiv(B, block_b),)

    # Weights are tiny (~0.4 MiB total); cast once, resident in VMEM across
    # all grid steps (constant block index -> fetched once).
    w1_bf = w1.astype(jnp.bfloat16)
    w2_bf = w2.astype(jnp.bfloat16)
    w3_bf = w3.astype(jnp.bfloat16)

    return pl.pallas_call(
        _mlp_kernel,
        out_shape=jax.ShapeDtypeStruct((B, OUT_DIM), jnp.float32),
        grid_spec=pltpu.PrefetchScalarGridSpec(
            num_scalar_prefetch=0,
            grid=grid,
            in_specs=[
                # activations: f32, tiled over batch, pipelined across steps
                pl.BlockSpec((block_b, D), lambda i: (i, 0)),
                # weights / biases: full, resident across all grid steps
                pl.BlockSpec(w1_bf.shape, lambda i: (0, 0)),
                pl.BlockSpec(b1.shape, lambda i: (0, 0)),
                pl.BlockSpec(w2_bf.shape, lambda i: (0, 0)),
                pl.BlockSpec(b2.shape, lambda i: (0, 0)),
                pl.BlockSpec(w3_bf.shape, lambda i: (0, 0)),
                pl.BlockSpec(b3.shape, lambda i: (0, 0)),
            ],
            # Narrow (block_b, 4) output block: last dim equals the full array
            # dim, so it is legal; ragged last batch block is masked by Pallas.
            out_specs=pl.BlockSpec((block_b, OUT_DIM), lambda i: (i, 0)),
        ),
        compiler_params=pltpu.CompilerParams(
            dimension_semantics=("parallel",),
            vmem_limit_bytes=32 * 1024 * 1024,
        ),
    )(x, w1_bf, b1, w2_bf, b2, w3_bf, b3)


def init_params(key, input_dim=INPUT_DIM, hidden_dims=HIDDEN_DIMS, out_dim=OUT_DIM):
    """Deterministic PyTorch-style (uniform +-1/sqrt(fan_in)) init.

    Weights are returned already transposed to (in_dim, out_dim) for the kernel
    (x @ W + b  ==  x @ W_pt.T + b).  Biases are (1, out_dim) so they broadcast
    over batch in-kernel.
    """
    dims = [input_dim] + list(hidden_dims) + [out_dim]
    params = []
    for i in range(len(dims) - 1):
        fan_in, fan_out = dims[i], dims[i + 1]
        key, kw, kb = jax.random.split(key, 3)
        bound = 1.0 / jnp.sqrt(fan_in)
        w = jax.random.uniform(kw, (fan_in, fan_out), jnp.float32, -bound, bound)
        b = jax.random.uniform(kb, (1, fan_out), jnp.float32, -bound, bound)
        params.extend([w, b])
    return params


def reference_forward_bf16(x, w1, b1, w2, b2, w3, b3):
    """Pure-JAX reference with the same bf16-matmul / f32-accumulate recipe."""
    h1 = jnp.maximum(
        jnp.dot(x.astype(jnp.bfloat16), w1.astype(jnp.bfloat16),
                preferred_element_type=jnp.float32) + b1, 0.0)
    h2 = jnp.maximum(
        jnp.dot(h1.astype(jnp.bfloat16), w2.astype(jnp.bfloat16),
                preferred_element_type=jnp.float32) + b2, 0.0)
    return jnp.dot(h2.astype(jnp.bfloat16), w3.astype(jnp.bfloat16),
                   preferred_element_type=jnp.float32) + b3


def reference_forward_f32(x, w1, b1, w2, b2, w3, b3):
    """True f32 reference (matches the PyTorch module's numerics)."""
    p = jax.lax.Precision.HIGHEST
    h1 = jnp.maximum(jnp.dot(x, w1, precision=p) + b1, 0.0)
    h2 = jnp.maximum(jnp.dot(h1, w2, precision=p) + b2, 0.0)
    return jnp.dot(h2, w3, precision=p) + b3


if __name__ == "__main__":
    key = jax.random.PRNGKey(0)
    key, kx = jax.random.split(key)

    # Small primary example (predict() path: a couple of feature rows).
    batch = 2
    x = jax.random.normal(kx, (batch, INPUT_DIM), jnp.float32)
    w1, b1, w2, b2, w3, b3 = init_params(key)

    out = nutrition_predictor_forward(x, w1, b1, w2, b2, w3, b3)
    out = jax.block_until_ready(out)
    assert out.shape == (batch, OUT_DIM)

    ref_bf16 = reference_forward_bf16(x, w1, b1, w2, b2, w3, b3)
    ref_f32 = reference_forward_f32(x, w1, b1, w2, b2, w3, b3)
    assert jnp.allclose(out, ref_bf16, atol=5e-3, rtol=5e-3), "mismatch vs bf16 reference"
    assert jnp.allclose(out, ref_f32, atol=2e-2, rtol=2e-2), "mismatch vs f32 reference"

    # Exercise the multi-step grid with a ragged last block
    # (B=1100 -> block_b=512, grid=3, last block 76 valid rows).
    key, kx2 = jax.random.split(key)
    B2 = 1100
    x2 = jax.random.normal(kx2, (B2, INPUT_DIM), jnp.float32)
    out2 = jax.block_until_ready(
        nutrition_predictor_forward(x2, w1, b1, w2, b2, w3, b3))
    ref2 = reference_forward_bf16(x2, w1, b1, w2, b2, w3, b3)
    assert out2.shape == (B2, OUT_DIM)
    assert jnp.allclose(out2, ref2, atol=5e-3, rtol=5e-3), "mismatch on ragged grid"

    print("KERNEL_OK")
</pallas_src>

<mosaic_0001>
module attributes {stable_mosaic.version = 11 : i64} {
  func.func @_mlp_kernel(%arg0: i32, %arg1: memref<2x512xf32, #tpu.memory_space<vmem>>, %arg2: memref<512x256xbf16, #tpu.memory_space<vmem>>, %arg3: memref<1x256xf32, #tpu.memory_space<vmem>>, %arg4: memref<256x128xbf16, #tpu.memory_space<vmem>>, %arg5: memref<1x128xf32, #tpu.memory_space<vmem>>, %arg6: memref<128x4xbf16, #tpu.memory_space<vmem>>, %arg7: memref<1x4xf32, #tpu.memory_space<vmem>>, %arg8: memref<2x4xf32, #tpu.memory_space<vmem>>) attributes {dimension_semantics = [#tpu.dimension_semantics<parallel>], iteration_bounds = array<i64: 1>, scalar_prefetch = 0 : i64, scratch_operands = 0 : i64, tpu.core_type = #tpu.core_type<tc>, window_params = [{transform_indices = @transform_0, window_bounds = array<i64: 2, 512>}, {pipeline_mode = #tpu.pipeline_mode<synchronous>, transform_indices = @transform_1, window_bounds = array<i64: 512, 256>}, {pipeline_mode = #tpu.pipeline_mode<synchronous>, transform_indices = @transform_2, window_bounds = array<i64: 1, 256>}, {pipeline_mode = #tpu.pipeline_mode<synchronous>, transform_indices = @transform_3, window_bounds = array<i64: 256, 128>}, {pipeline_mode = #tpu.pipeline_mode<synchronous>, transform_indices = @transform_4, window_bounds = array<i64: 1, 128>}, {pipeline_mode = #tpu.pipeline_mode<synchronous>, transform_indices = @transform_5, window_bounds = array<i64: 128, 4>}, {pipeline_mode = #tpu.pipeline_mode<synchronous>, transform_indices = @transform_6, window_bounds = array<i64: 1, 4>}, {transform_indices = @transform_7, window_bounds = array<i64: 2, 4>}]} {
    %c0 = arith.constant 0 : index
    %c0_0 = arith.constant 0 : index
    %0 = vector.load %arg1[%c0, %c0_0] : memref<2x512xf32, #tpu.memory_space<vmem>>, vector<2x512xf32>
    %1 = arith.truncf %0 : vector<2x512xf32> to vector<2x512xbf16>
    %c0_1 = arith.constant 0 : index
    %c0_2 = arith.constant 0 : index
    %2 = vector.load %arg2[%c0_1, %c0_2] : memref<512x256xbf16, #tpu.memory_space<vmem>>, vector<512x256xbf16>
    %cst = arith.constant dense<0.000000e+00> : vector<2x256xf32>
    %3 = tpu.matmul %1, %2, %cst {dimension_numbers = #tpu.dot_dimension_numbers<[1], [0], [0], [1], [0, 0, 1, 1], [], []>} : vector<2x512xbf16>, vector<512x256xbf16>, vector<2x256xf32> -> vector<2x256xf32>
    %c0_3 = arith.constant 0 : index
    %c0_4 = arith.constant 0 : index
    %4 = vector.load %arg3[%c0_3, %c0_4] : memref<1x256xf32, #tpu.memory_space<vmem>>, vector<1x256xf32>
    %5 = vector.broadcast %4 : vector<1x256xf32> to vector<2x256xf32>
    %6 = arith.addf %3, %5 : vector<2x256xf32>
    %cst_5 = arith.constant 0.000000e+00 : f32
    %7 = vector.broadcast %cst_5 : f32 to vector<2x256xf32>
    %8 = arith.maximumf %6, %7 : vector<2x256xf32>
    %9 = arith.truncf %8 : vector<2x256xf32> to vector<2x256xbf16>
    %c0_6 = arith.constant 0 : index
    %c0_7 = arith.constant 0 : index
    %10 = vector.load %arg4[%c0_6, %c0_7] : memref<256x128xbf16, #tpu.memory_space<vmem>>, vector<256x128xbf16>
    %cst_8 = arith.constant dense<0.000000e+00> : vector<2x128xf32>
    %11 = tpu.matmul %9, %10, %cst_8 {dimension_numbers = #tpu.dot_dimension_numbers<[1], [0], [0], [1], [0, 0, 1, 1], [], []>} : vector<2x256xbf16>, vector<256x128xbf16>, vector<2x128xf32> -> vector<2x128xf32>
    %c0_9 = arith.constant 0 : index
    %c0_10 = arith.constant 0 : index
    %12 = vector.load %arg5[%c0_9, %c0_10] : memref<1x128xf32, #tpu.memory_space<vmem>>, vector<1x128xf32>
    %13 = vector.broadcast %12 : vector<1x128xf32> to vector<2x128xf32>
    %14 = arith.addf %11, %13 : vector<2x128xf32>
    %cst_11 = arith.constant 0.000000e+00 : f32
    %15 = vector.broadcast %cst_11 : f32 to vector<2x128xf32>
    %16 = arith.maximumf %14, %15 : vector<2x128xf32>
    %17 = arith.truncf %16 : vector<2x128xf32> to vector<2x128xbf16>
    %c0_12 = arith.constant 0 : index
    %c0_13 = arith.constant 0 : index
    %18 = vector.load %arg6[%c0_12, %c0_13] : memref<128x4xbf16, #tpu.memory_space<vmem>>, vector<128x4xbf16>
    %cst_14 = arith.constant dense<0.000000e+00> : vector<2x4xf32>
    %19 = tpu.matmul %17, %18, %cst_14 {dimension_numbers = #tpu.dot_dimension_numbers<[1], [0], [0], [1], [0, 0, 1, 1], [], []>} : vector<2x128xbf16>, vector<128x4xbf16>, vector<2x4xf32> -> vector<2x4xf32>
    %c0_15 = arith.constant 0 : index
    %c0_16 = arith.constant 0 : index
    %20 = vector.load %arg7[%c0_15, %c0_16] : memref<1x4xf32, #tpu.memory_space<vmem>>, vector<1x4xf32>
    %21 = vector.broadcast %20 : vector<1x4xf32> to vector<2x4xf32>
    %22 = arith.addf %19, %21 : vector<2x4xf32>
    %c0_17 = arith.constant 0 : index
    %c0_18 = arith.constant 0 : index
    %23 = vector.load %arg8[%c0_17, %c0_18] : memref<2x4xf32, #tpu.memory_space<vmem>>, vector<2x4xf32>
    tpu.vector_store %arg8[%c0_17, %c0_18], %22 {strides = array<i32>} : memref<2x4xf32, #tpu.memory_space<vmem>>, vector<2x4xf32>,
    return
  }
  func.func @transform_0(%arg0: i32) -> (i32, i32) {
    %c0_i32 = arith.constant 0 : i32
    %c0_i32_0 = arith.constant 0 : i32
    return %arg0, %c0_i32 : i32, i32
  }
  func.func @transform_1(%arg0: i32) -> (i32, i32) {
    %c0_i32 = arith.constant 0 : i32
    %c0_i32_0 = arith.constant 0 : i32
    %c0_i32_1 = arith.constant 0 : i32
    return %c0_i32, %c0_i32_0 : i32, i32
  }
  func.func @transform_2(%arg0: i32) -> (i32, i32) {
    %c0_i32 = arith.constant 0 : i32
    %c0_i32_0 = arith.constant 0 : i32
    %c0_i32_1 = arith.constant 0 : i32
    return %c0_i32, %c0_i32_0 : i32, i32
  }
  func.func @transform_3(%arg0: i32) -> (i32, i32) {
    %c0_i32 = arith.constant 0 : i32
    %c0_i32_0 = arith.constant 0 : i32
    %c0_i32_1 = arith.constant 0 : i32
    return %c0_i32, %c0_i32_0 : i32, i32
  }
  func.func @transform_4(%arg0: i32) -> (i32, i32) {
    %c0_i32 = arith.constant 0 : i32
    %c0_i32_0 = arith.constant 0 : i32
    %c0_i32_1 = arith.constant 0 : i32
    return %c0_i32, %c0_i32_0 : i32, i32
  }
  func.func @transform_5(%arg0: i32) -> (i32, i32) {
    %c0_i32 = arith.constant 0 : i32
    %c0_i32_0 = arith.constant 0 : i32
    %c0_i32_1 = arith.constant 0 : i32
    return %c0_i32, %c0_i32_0 : i32, i32
  }
  func.func @transform_6(%arg0: i32) -> (i32, i32) {
    %c0_i32 = arith.constant 0 : i32
    %c0_i32_0 = arith.constant 0 : i32
    %c0_i32_1 = arith.constant 0 : i32
    return %c0_i32, %c0_i32_0 : i32, i32
  }
  func.func @transform_7(%arg0: i32) -> (i32, i32) {
    %c0_i32 = arith.constant 0 : i32
    %c0_i32_0 = arith.constant 0 : i32
    return %arg0, %c0_i32 : i32, i32
  }
}

</mosaic_0001>

<llo_original>
// kernel: nutrition_predictor_forward.1
$region0: #{nutrition_predictor_forward.1}
  #allocation0 [shape = 'u32[]', space=smem, size = 0x4, offset = 0x4, fixed_abs, tag = 'smem constant byte address 0x4 - core index']
  #allocation1 [shape = 'u32[144,128]{1,0:T(1,128)}', space=vmem, size = 0x12000, scoped, tag = 'internal scratch']
  %s0 = inlined_call_operand.vmem [shape: f32[2,512], index: 0, kind: input, shape index: {}]
  %s1 = inlined_call_operand.vmem [shape: bf16[512,256], index: 1, kind: input, shape index: {}]
  %s2 = inlined_call_operand.vmem [shape: f32[1,256], index: 2, kind: input, shape index: {}]
  %s3 = inlined_call_operand.vmem [shape: bf16[256,128], index: 3, kind: input, shape index: {}]
  %s4 = inlined_call_operand.vmem [shape: f32[1,128], index: 4, kind: input, shape index: {}]
  %s5 = inlined_call_operand.vmem [shape: bf16[128,4], index: 5, kind: input, shape index: {}]
  %s6 = inlined_call_operand.vmem [shape: f32[1,4], index: 6, kind: input, shape index: {}]
  %s7 = inlined_call_operand.hbm [shape: f32[2,4], index: 7, kind: output, shape index: {}]
  %s8 = sld [smem:[#allocation0]]
  $region38: #{nutrition_predictor_forward.1} parent=0
    _
  %s10 = ssub.s32 1, %s8
  %s11 = scalar_select 0, %s10, %s8
  $region1: #{nutrition_predictor_forward.1} parent=0
    #allocation2 [shape = 'u8[1024]{0}', space=vmem, size = 0x400, scoped, tag = 'output window, operand 0, single buffered']
    #allocation3 [shape = 's32[1]{0}', space=sflag, size = 0x4, scoped, tag = 'scoped memory for nutrition_predictor_forward.1']
    %12 = vsyncpa [#allocation3], 0
    // Predicated region
    $region2: #{nutrition_predictor_forward.1} parent=1 // pred_check
      _
    $region3: #{nutrition_predictor_forward.1} parent=1 // pred_check_branch
      %14 = sbr.rel (0) target = $region5
    $region4: #{nutrition_predictor_forward.1} parent=1 // pred_region
      _
    $region5: #{nutrition_predictor_forward.1} parent=1 // pred_fallthru
      _
    // Predicated region
    $region6: #{nutrition_predictor_forward.1} parent=1 // pred_check
      _
    $region7: #{nutrition_predictor_forward.1} parent=1 // pred_check_branch
      %16 = sbr.rel (0) target = $region9
    $region8: #{nutrition_predictor_forward.1} parent=1 // pred_region
      _
    $region9: #{nutrition_predictor_forward.1} parent=1 // pred_fallthru
      _
    // Predicated region
    $region10: #{nutrition_predictor_forward.1} parent=1 // pred_check
      _
    $region11: #{nutrition_predictor_forward.1} parent=1 // pred_check_branch
      %18 = sbr.rel (0) target = $region13
    $region12: #{nutrition_predictor_forward.1} parent=1 // pred_region
      _
    $region13: #{nutrition_predictor_forward.1} parent=1 // pred_fallthru
      _
    // Predicated region
    $region14: #{nutrition_predictor_forward.1} parent=1 // pred_check
      _
    $region15: #{nutrition_predictor_forward.1} parent=1 // pred_check_branch
      %20 = sbr.rel (0) target = $region17
    $region16: #{nutrition_predictor_forward.1} parent=1 // pred_region
      _
    $region17: #{nutrition_predictor_forward.1} parent=1 // pred_fallthru
      _
    // Predicated region
    $region18: #{nutrition_predictor_forward.1} parent=1 // pred_check
      _
    $region19: #{nutrition_predictor_forward.1} parent=1 // pred_check_branch
      %22 = sbr.rel (0) target = $region21
    $region20: #{nutrition_predictor_forward.1} parent=1 // pred_region
      _
    $region21: #{nutrition_predictor_forward.1} parent=1 // pred_fallthru
      _
    // Predicated region
    $region22: #{nutrition_predictor_forward.1} parent=1 // pred_check
      _
    $region23: #{nutrition_predictor_forward.1} parent=1 // pred_check_branch
      %24 = sbr.rel (0) target = $region25
    $region24: #{nutrition_predictor_forward.1} parent=1 // pred_region
      _
    $region25: #{nutrition_predictor_forward.1} parent=1 // pred_fallthru
      _
    // Predicated region
    $region26: #{nutrition_predictor_forward.1} parent=1 // pred_check
      _
    $region27: #{nutrition_predictor_forward.1} parent=1 // pred_check_branch
      %26 = sbr.rel (0) target = $region29
    $region28: #{nutrition_predictor_forward.1} parent=1 // pred_region
      _
    $region29: #{nutrition_predictor_forward.1} parent=1 // pred_fallthru
      _
    %v28 = vld [vmem:[%s0] sm:$0xff]
    %v30 = vcombine.high %v28, %v28
    %v32 = vunpack.c.l.s4 1983009808
    %v33 = vunpack.c.0.s8 %v32
    %v34 = vlaneseq
    %v35 = vshrl.u32 %v34, 7
    %v36 = vsub.s32 %v33, %v35
    %v37 = vrot.slane %v28, %v36
    %v39 = vunpack.c.l.s4 1983009808
    %v40 = vunpack.c.0.s8 %v39
    %v41 = vlaneseq
    %v42 = vshrl.u32 %v41, 7
    %v43 = vsub.s32 %v40, %v42
    %v44 = vrot.slane %v30, %v43
    %v45 = vcombine.high %v37, %v37
    %v46 = vcombine.high %v44, %v44
    %v51 = vpack.c.bf16 %v37, %v37
    %v52 = vpack.c.bf16 %v45, %v45
    %v53 = vpack.c.bf16 %v44, %v44
    %v54 = vpack.c.bf16 %v46, %v46
    %v55 = vld [vmem:[%s1] sm:$0xff]
    %v56 = vld [vmem:[%s1 + $0x8] sm:$0xff]
    %v57 = vld [vmem:[%s1 + $0x10] sm:$0xff]
    %v58 = vld [vmem:[%s1 + $0x18] sm:$0xff]
    %v59 = vld [vmem:[%s1 + $0x20] sm:$0xff]
    %v60 = vld [vmem:[%s1 + $0x28] sm:$0xff]
    %v61 = vld [vmem:[%s1 + $0x30] sm:$0xff]
    %v62 = vld [vmem:[%s1 + $0x38] sm:$0xff]
    %v63 = vld [vmem:[%s1 + $0x40] sm:$0xff]
    %v64 = vld [vmem:[%s1 + $0x48] sm:$0xff]
    %v65 = vld [vmem:[%s1 + $0x50] sm:$0xff]
    %v66 = vld [vmem:[%s1 + $0x58] sm:$0xff]
    %v67 = vld [vmem:[%s1 + $0x60] sm:$0xff]
    %v68 = vld [vmem:[%s1 + $0x68] sm:$0xff]
    %v69 = vld [vmem:[%s1 + $0x70] sm:$0xff]
    %v70 = vld [vmem:[%s1 + $0x78] sm:$0xff]
    %v71 = vld [vmem:[%s1 + $0x80] sm:$0xff]
    %v72 = vld [vmem:[%s1 + $0x88] sm:$0xff]
    %v73 = vld [vmem:[%s1 + $0x90] sm:$0xff]
    %v74 = vld [vmem:[%s1 + $0x98] sm:$0xff]
    %v75 = vld [vmem:[%s1 + $0xa0] sm:$0xff]
    %v76 = vld [vmem:[%s1 + $0xa8] sm:$0xff]
    %v77 = vld [vmem:[%s1 + $0xb0] sm:$0xff]
    %v78 = vld [vmem:[%s1 + $0xb8] sm:$0xff]
    %v79 = vld [vmem:[%s1 + $0xc0] sm:$0xff]
    %v80 = vld [vmem:[%s1 + $0xc8] sm:$0xff]
    %v81 = vld [vmem:[%s1 + $0xd0] sm:$0xff]
    %v82 = vld [vmem:[%s1 + $0xd8] sm:$0xff]
    %v83 = vld [vmem:[%s1 + $0xe0] sm:$0xff]
    %v84 = vld [vmem:[%s1 + $0xe8] sm:$0xff]
    %v85 = vld [vmem:[%s1 + $0xf0] sm:$0xff]
    %v86 = vld [vmem:[%s1 + $0xf8] sm:$0xff]
    %v87 = vld [vmem:[%s1 + $0x100] sm:$0xff]
    %v88 = vld [vmem:[%s1 + $0x108] sm:$0xff]
    %v89 = vld [vmem:[%s1 + $0x110] sm:$0xff]
    %v90 = vld [vmem:[%s1 + $0x118] sm:$0xff]
    %v91 = vld [vmem:[%s1 + $0x120] sm:$0xff]
    %v92 = vld [vmem:[%s1 + $0x128] sm:$0xff]
    %v93 = vld [vmem:[%s1 + $0x130] sm:$0xff]
    %v94 = vld [vmem:[%s1 + $0x138] sm:$0xff]
    %v95 = vld [vmem:[%s1 + $0x140] sm:$0xff]
    %v96 = vld [vmem:[%s1 + $0x148] sm:$0xff]
    %v97 = vld [vmem:[%s1 + $0x150] sm:$0xff]
    %v98 = vld [vmem:[%s1 + $0x158] sm:$0xff]
    %v99 = vld [vmem:[%s1 + $0x160] sm:$0xff]
    %v100 = vld [vmem:[%s1 + $0x168] sm:$0xff]
    %v101 = vld [vmem:[%s1 + $0x170] sm:$0xff]
    %v102 = vld [vmem:[%s1 + $0x178] sm:$0xff]
    %v103 = vld [vmem:[%s1 + $0x180] sm:$0xff]
    %v104 = vld [vmem:[%s1 + $0x188] sm:$0xff]
    %v105 = vld [vmem:[%s1 + $0x190] sm:$0xff]
    %v106 = vld [vmem:[%s1 + $0x198] sm:$0xff]
    %v107 = vld [vmem:[%s1 + $0x1a0] sm:$0xff]
    %v108 = vld [vmem:[%s1 + $0x1a8] sm:$0xff]
    %v109 = vld [vmem:[%s1 + $0x1b0] sm:$0xff]
    %v110 = vld [vmem:[%s1 + $0x1b8] sm:$0xff]
    %v111 = vld [vmem:[%s1 + $0x1c0] sm:$0xff]
    %v112 = vld [vmem:[%s1 + $0x1c8] sm:$0xff]
    %v113 = vld [vmem:[%s1 + $0x1d0] sm:$0xff]
    %v114 = vld [vmem:[%s1 + $0x1d8] sm:$0xff]
    %v115 = vld [vmem:[%s1 + $0x1e0] sm:$0xff]
    %v116 = vld [vmem:[%s1 + $0x1e8] sm:$0xff]
    %v117 = vld [vmem:[%s1 + $0x1f0] sm:$0xff]
    %v118 = vld [vmem:[%s1 + $0x1f8] sm:$0xff]
    %v119 = vld [vmem:[%s2] sm:$0x3]
    %v121 = vlaneseq
    %v122 = vshrl.u32 %v121, 7
    %v123 = vsub.s32 0, %v122
    %v124 = vrot.slane %v119, %v123
    %v125 = vlaneseq
    %v126 = vshrl.u32 %v125, 7
    %v127 = vsub.s32 1, %v126
    %v128 = vrot.slane %v119, %v127
    %v195 = vunpack.c.l.b16 %v55
    %v196 = vunpack.c.h.b16 %v55
    %v197 = vunpack.c.l.b16 %v56
    %v198 = vunpack.c.h.b16 %v56
    %v199 = vunpack.c.l.b16 %v57
    %v200 = vunpack.c.h.b16 %v57
    %v201 = vunpack.c.l.b16 %v58
    %v202 = vunpack.c.h.b16 %v58
    %v203 = vunpack.c.l.b16 %v59
    %v204 = vunpack.c.h.b16 %v59
    %v205 = vunpack.c.l.b16 %v60
    %v206 = vunpack.c.h.b16 %v60
    %v207 = vunpack.c.l.b16 %v61
    %v208 = vunpack.c.h.b16 %v61
    %v209 = vunpack.c.l.b16 %v62
    %v210 = vunpack.c.h.b16 %v62
    %v211 = vunpack.c.l.b16 %v63
    %v212 = vunpack.c.h.b16 %v63
    %v213 = vunpack.c.l.b16 %v64
    %v214 = vunpack.c.h.b16 %v64
    %v215 = vunpack.c.l.b16 %v65
    %v216 = vunpack.c.h.b16 %v65
    %v217 = vunpack.c.l.b16 %v66
    %v218 = vunpack.c.h.b16 %v66
    %v219 = vunpack.c.l.b16 %v67
    %v220 = vunpack.c.h.b16 %v67
    %v221 = vunpack.c.l.b16 %v68
    %v222 = vunpack.c.h.b16 %v68
    %v223 = vunpack.c.l.b16 %v69
    %v224 = vunpack.c.h.b16 %v69
    %v225 = vunpack.c.l.b16 %v70
    %v226 = vunpack.c.h.b16 %v70
    %v227 = vunpack.c.l.b16 %v71
    %v228 = vunpack.c.h.b16 %v71
    %v229 = vunpack.c.l.b16 %v72
    %v230 = vunpack.c.h.b16 %v72
    %v231 = vunpack.c.l.b16 %v73
    %v232 = vunpack.c.h.b16 %v73
    %v233 = vunpack.c.l.b16 %v74
    %v234 = vunpack.c.h.b16 %v74
    %v235 = vunpack.c.l.b16 %v75
    %v236 = vunpack.c.h.b16 %v75
    %v237 = vunpack.c.l.b16 %v76
    %v238 = vunpack.c.h.b16 %v76
    %v239 = vunpack.c.l.b16 %v77
    %v240 = vunpack.c.h.b16 %v77
    %v241 = vunpack.c.l.b16 %v78
    %v242 = vunpack.c.h.b16 %v78
    %v243 = vunpack.c.l.b16 %v79
    %v244 = vunpack.c.h.b16 %v79
    %v245 = vunpack.c.l.b16 %v80
    %v246 = vunpack.c.h.b16 %v80
    %v247 = vunpack.c.l.b16 %v81
    %v248 = vunpack.c.h.b16 %v81
    %v249 = vunpack.c.l.b16 %v82
    %v250 = vunpack.c.h.b16 %v82
    %v251 = vunpack.c.l.b16 %v83
    %v252 = vunpack.c.h.b16 %v83
    %v253 = vunpack.c.l.b16 %v84
    %v254 = vunpack.c.h.b16 %v84
    %v255 = vunpack.c.l.b16 %v85
    %v256 = vunpack.c.h.b16 %v85
    %v257 = vunpack.c.l.b16 %v86
    %v258 = vunpack.c.h.b16 %v86
    %v259 = vunpack.c.l.b16 %v87
    %v260 = vunpack.c.h.b16 %v87
    %v261 = vunpack.c.l.b16 %v88
    %v262 = vunpack.c.h.b16 %v88
    %v263 = vunpack.c.l.b16 %v89
    %v264 = vunpack.c.h.b16 %v89
    %v265 = vunpack.c.l.b16 %v90
    %v266 = vunpack.c.h.b16 %v90
    %v267 = vunpack.c.l.b16 %v91
    %v268 = vunpack.c.h.b16 %v91
    %v269 = vunpack.c.l.b16 %v92
    %v270 = vunpack.c.h.b16 %v92
    %v271 = vunpack.c.l.b16 %v93
    %v272 = vunpack.c.h.b16 %v93
    %v273 = vunpack.c.l.b16 %v94
    %v274 = vunpack.c.h.b16 %v94
    %v275 = vunpack.c.l.b16 %v95
    %v276 = vunpack.c.h.b16 %v95
    %v277 = vunpack.c.l.b16 %v96
    %v278 = vunpack.c.h.b16 %v96
    %v279 = vunpack.c.l.b16 %v97
    %v280 = vunpack.c.h.b16 %v97
    %v281 = vunpack.c.l.b16 %v98
    %v282 = vunpack.c.h.b16 %v98
    %v283 = vunpack.c.l.b16 %v99
    %v284 = vunpack.c.h.b16 %v99
    %v285 = vunpack.c.l.b16 %v100
    %v286 = vunpack.c.h.b16 %v100
    %v287 = vunpack.c.l.b16 %v101
    %v288 = vunpack.c.h.b16 %v101
    %v289 = vunpack.c.l.b16 %v102
    %v290 = vunpack.c.h.b16 %v102
    %v291 = vunpack.c.l.b16 %v103
    %v292 = vunpack.c.h.b16 %v103
    %v293 = vunpack.c.l.b16 %v104
    %v294 = vunpack.c.h.b16 %v104
    %v295 = vunpack.c.l.b16 %v105
    %v296 = vunpack.c.h.b16 %v105
    %v297 = vunpack.c.l.b16 %v106
    %v298 = vunpack.c.h.b16 %v106
    %v299 = vunpack.c.l.b16 %v107
    %v300 = vunpack.c.h.b16 %v107
    %v301 = vunpack.c.l.b16 %v108
    %v302 = vunpack.c.h.b16 %v108
    %v303 = vunpack.c.l.b16 %v109
    %v304 = vunpack.c.h.b16 %v109
    %v305 = vunpack.c.l.b16 %v110
    %v306 = vunpack.c.h.b16 %v110
    %v307 = vunpack.c.l.b16 %v111
    %v308 = vunpack.c.h.b16 %v111
    %v309 = vunpack.c.l.b16 %v112
    %v310 = vunpack.c.h.b16 %v112
    %v311 = vunpack.c.l.b16 %v113
    %v312 = vunpack.c.h.b16 %v113
    %v313 = vunpack.c.l.b16 %v114
    %v314 = vunpack.c.h.b16 %v114
    %v315 = vunpack.c.l.b16 %v115
    %v316 = vunpack.c.h.b16 %v115
    %v317 = vunpack.c.l.b16 %v116
    %v318 = vunpack.c.h.b16 %v116
    %v319 = vunpack.c.l.b16 %v117
    %v320 = vunpack.c.h.b16 %v117
    %v321 = vunpack.c.l.b16 %v118
    %v322 = vunpack.c.h.b16 %v118
    %v323 = vpack.c.b16 %v197, %v195
    %v324 = vpack.c.b16 %v198, %v196
    %v325 = vpack.c.b16 %v201, %v199
    %v326 = vpack.c.b16 %v202, %v200
    %v327 = vpack.c.b16 %v205, %v203
    %v328 = vpack.c.b16 %v206, %v204
    %v329 = vpack.c.b16 %v209, %v207
    %v330 = vpack.c.b16 %v210, %v208
    %v331 = vpack.c.b16 %v213, %v211
    %v332 = vpack.c.b16 %v214, %v212
    %v333 = vpack.c.b16 %v217, %v215
    %v334 = vpack.c.b16 %v218, %v216
    %v335 = vpack.c.b16 %v221, %v219
    %v336 = vpack.c.b16 %v222, %v220
    %v337 = vpack.c.b16 %v225, %v223
    %v338 = vpack.c.b16 %v226, %v224
    %v339 = vpack.c.b16 %v229, %v227
    %v340 = vpack.c.b16 %v230, %v228
    %v341 = vpack.c.b16 %v233, %v231
    %v342 = vpack.c.b16 %v234, %v232
    %v343 = vpack.c.b16 %v237, %v235
    %v344 = vpack.c.b16 %v238, %v236
    %v345 = vpack.c.b16 %v241, %v239
    %v346 = vpack.c.b16 %v242, %v240
    %v347 = vpack.c.b16 %v245, %v243
    %v348 = vpack.c.b16 %v246, %v244
    %v349 = vpack.c.b16 %v249, %v247
    %v350 = vpack.c.b16 %v250, %v248
    %v351 = vpack.c.b16 %v253, %v251
    %v352 = vpack.c.b16 %v254, %v252
    %v353 = vpack.c.b16 %v257, %v255
    %v354 = vpack.c.b16 %v258, %v256
    %v355 = vpack.c.b16 %v261, %v259
    %v356 = vpack.c.b16 %v262, %v260
    %v357 = vpack.c.b16 %v265, %v263
    %v358 = vpack.c.b16 %v266, %v264
    %v359 = vpack.c.b16 %v269, %v267
    %v360 = vpack.c.b16 %v270, %v268
    %v361 = vpack.c.b16 %v273, %v271
    %v362 = vpack.c.b16 %v274, %v272
    %v363 = vpack.c.b16 %v277, %v275
    %v364 = vpack.c.b16 %v278, %v276
    %v365 = vpack.c.b16 %v281, %v279
    %v366 = vpack.c.b16 %v282, %v280
    %v367 = vpack.c.b16 %v285, %v283
    %v368 = vpack.c.b16 %v286, %v284
    %v369 = vpack.c.b16 %v289, %v287
    %v370 = vpack.c.b16 %v290, %v288
    %v371 = vpack.c.b16 %v293, %v291
    %v372 = vpack.c.b16 %v294, %v292
    %v373 = vpack.c.b16 %v297, %v295
    %v374 = vpack.c.b16 %v298, %v296
    %v375 = vpack.c.b16 %v301, %v299
    %v376 = vpack.c.b16 %v302, %v300
    %v377 = vpack.c.b16 %v305, %v303
    %v378 = vpack.c.b16 %v306, %v304
    %v379 = vpack.c.b16 %v309, %v307
    %v380 = vpack.c.b16 %v310, %v308
    %v381 = vpack.c.b16 %v313, %v311
    %v382 = vpack.c.b16 %v314, %v312
    %v383 = vpack.c.b16 %v317, %v315
    %v384 = vpack.c.b16 %v318, %v316
    %v385 = vpack.c.b16 %v321, %v319
    %v386 = vpack.c.b16 %v322, %v320
    %451 = vmatprep.subr.bf16.mxu0 %v324
    %452 = vmatpush1.bf16.msra.mxu0 %v323
    %453 = vmatprep.subr.bf16.mxu0 %v326
    %454 = vmatpush1.bf16.msra.mxu0 %v325
    %455 = vmatprep.subr.bf16.mxu0 %v328
    %456 = vmatpush1.bf16.msra.mxu0 %v327
    %457 = vmatprep.subr.bf16.mxu0 %v330
    %458 = vmatpush1.bf16.msra.mxu0 %v329
    %459 = vmatprep.subr.bf16.mxu0 %v332
    %460 = vmatpush1.bf16.msra.mxu0 %v331
    %461 = vmatprep.subr.bf16.mxu0 %v334
    %462 = vmatpush1.bf16.msra.mxu0 %v333
    %463 = vmatprep.subr.bf16.mxu0 %v336
    %464 = vmatpush1.bf16.msra.mxu0 %v335
    %465 = vmatprep.subr.bf16.mxu0 %v338
    %466 = vmatpush1.bf16.msra.mxu0 %v337
    %467 = vmatprep.subr.bf16.mxu0 %v340
    %468 = vmatpush1.bf16.msra.mxu0 %v339
    %469 = vmatprep.subr.bf16.mxu0 %v342
    %470 = vmatpush1.bf16.msra.mxu0 %v341
    %471 = vmatprep.subr.bf16.mxu0 %v344
    %472 = vmatpush1.bf16.msra.mxu0 %v343
    %473 = vmatprep.subr.bf16.mxu0 %v346
    %474 = vmatpush1.bf16.msra.mxu0 %v345
    %475 = vmatprep.subr.bf16.mxu0 %v348
    %476 = vmatpush1.bf16.msra.mxu0 %v347
    %477 = vmatprep.subr.bf16.mxu0 %v350
    %478 = vmatpush1.bf16.msra.mxu0 %v349
    %479 = vmatprep.subr.bf16.mxu0 %v352
    %480 = vmatpush1.bf16.msra.mxu0 %v351
    %481 = vmatprep.subr.bf16.mxu0 %v354
    %482 = vmatpush1.bf16.msra.mxu0 %v353
    %483 = vmatprep.mubr.bf16.mxu0 %v52
    %484 = vmatmul.mubr.bf16.gmra.mrb[0].mxu0 %v51
    %v485 = vpop.f32.mrb[0].mxu0
    %v486 = vadd.f32 %v124, %v485
    %v487 = vpop.f32.mrb[0].mxu0
    %v488 = vadd.f32 %v128, %v487
    %v489 = vpop.f32.mrb[0].mxu0
    %v490 = vpop.f32.mrb[0].mxu0
    %491 = vdwg.mxu0
    %492 = vmatprep.subr.bf16.mxu0 %v356
    %493 = vmatpush1.bf16.msra.mxu0 %v355
    %494 = vmatprep.subr.bf16.mxu0 %v358
    %495 = vmatpush1.bf16.msra.mxu0 %v357
    %496 = vmatprep.subr.bf16.mxu0 %v360
    %497 = vmatpush1.bf16.msra.mxu0 %v359
    %498 = vmatprep.subr.bf16.mxu0 %v362
    %499 = vmatpush1.bf16.msra.mxu0 %v361
    %500 = vmatprep.subr.bf16.mxu0 %v364
    %501 = vmatpush1.bf16.msra.mxu0 %v363
    %502 = vmatprep.subr.bf16.mxu0 %v366
    %503 = vmatpush1.bf16.msra.mxu0 %v365
    %504 = vmatprep.subr.bf16.mxu0 %v368
    %505 = vmatpush1.bf16.msra.mxu0 %v367
    %506 = vmatprep.subr.bf16.mxu0 %v370
    %507 = vmatpush1.bf16.msra.mxu0 %v369
    %508 = vmatprep.subr.bf16.mxu0 %v372
    %509 = vmatpush1.bf16.msra.mxu0 %v371
    %510 = vmatprep.subr.bf16.mxu0 %v374
    %511 = vmatpush1.bf16.msra.mxu0 %v373
    %512 = vmatprep.subr.bf16.mxu0 %v376
    %513 = vmatpush1.bf16.msra.mxu0 %v375
    %514 = vmatprep.subr.bf16.mxu0 %v378
    %515 = vmatpush1.bf16.msra.mxu0 %v377
    %516 = vmatprep.subr.bf16.mxu0 %v380
    %517 = vmatpush1.bf16.msra.mxu0 %v379
    %518 = vmatprep.subr.bf16.mxu0 %v382
    %519 = vmatpush1.bf16.msra.mxu0 %v381
    %520 = vmatprep.subr.bf16.mxu0 %v384
    %521 = vmatpush1.bf16.msra.mxu0 %v383
    %522 = vmatprep.subr.bf16.mxu0 %v386
    %523 = vmatpush1.bf16.msra.mxu0 %v385
    %524 = vmatprep.mubr.bf16.mxu0 %v54
    %525 = vmatmul.mubr.bf16.gmra.mrb[0].mxu0 %v53
    %v526 = vpop.f32.mrb[0].mxu0
    %v527 = vadd.f32 %v486, %v526
    %v528 = vpop.f32.mrb[0].mxu0
    %v529 = vadd.f32 %v488, %v528
    %v530 = vpop.f32.mrb[0].mxu0
    %v531 = vpop.f32.mrb[0].mxu0
    %532 = vdwg.mxu0
    %v533 = vmax.f32 %v527, 0.0
    %v534 = vmax.f32 %v529, 0.0
    %v535 = vpack.c.bf16 %v533, %v533
    %v536 = vpack.c.bf16 %v534, %v534
    %v537 = vld [vmem:[%s3] sm:$0xf]
    %v538 = vld [vmem:[%s3 + $0x4] sm:$0xf]
    %v539 = vld [vmem:[%s3 + $0x8] sm:$0xf]
    %v540 = vld [vmem:[%s3 + $0xc] sm:$0xf]
    %v541 = vld [vmem:[%s3 + $0x10] sm:$0xf]
    %v542 = vld [vmem:[%s3 + $0x14] sm:$0xf]
    %v543 = vld [vmem:[%s3 + $0x18] sm:$0xf]
    %v544 = vld [vmem:[%s3 + $0x1c] sm:$0xf]
    %v545 = vld [vmem:[%s3 + $0x20] sm:$0xf]
    %v546 = vld [vmem:[%s3 + $0x24] sm:$0xf]
    %v547 = vld [vmem:[%s3 + $0x28] sm:$0xf]
    %v548 = vld [vmem:[%s3 + $0x2c] sm:$0xf]
    %v549 = vld [vmem:[%s3 + $0x30] sm:$0xf]
    %v550 = vld [vmem:[%s3 + $0x34] sm:$0xf]
    %v551 = vld [vmem:[%s3 + $0x38] sm:$0xf]
    %v552 = vld [vmem:[%s3 + $0x3c] sm:$0xf]
    %v553 = vld [vmem:[%s3 + $0x40] sm:$0xf]
    %v554 = vld [vmem:[%s3 + $0x44] sm:$0xf]
    %v555 = vld [vmem:[%s3 + $0x48] sm:$0xf]
    %v556 = vld [vmem:[%s3 + $0x4c] sm:$0xf]
    %v557 = vld [vmem:[%s3 + $0x50] sm:$0xf]
    %v558 = vld [vmem:[%s3 + $0x54] sm:$0xf]
    %v559 = vld [vmem:[%s3 + $0x58] sm:$0xf]
    %v560 = vld [vmem:[%s3 + $0x5c] sm:$0xf]
    %v561 = vld [vmem:[%s3 + $0x60] sm:$0xf]
    %v562 = vld [vmem:[%s3 + $0x64] sm:$0xf]
    %v563 = vld [vmem:[%s3 + $0x68] sm:$0xf]
    %v564 = vld [vmem:[%s3 + $0x6c] sm:$0xf]
    %v565 = vld [vmem:[%s3 + $0x70] sm:$0xf]
    %v566 = vld [vmem:[%s3 + $0x74] sm:$0xf]
    %v567 = vld [vmem:[%s3 + $0x78] sm:$0xf]
    %v568 = vld [vmem:[%s3 + $0x7c] sm:$0xf]
    %v569 = vld [vmem:[%s4] sm:$0x1]
    %v571 = vlaneseq
    %v572 = vshrl.u32 %v571, 7
    %v573 = vsub.s32 0, %v572
    %v574 = vrot.slane %v569, %v573
    %v608 = vunpack.c.l.b16 %v537
    %v609 = vunpack.c.l.b16 %v538
    %v610 = vunpack.c.l.b16 %v539
    %v611 = vunpack.c.l.b16 %v540
    %v612 = vunpack.c.l.b16 %v541
    %v613 = vunpack.c.l.b16 %v542
    %v614 = vunpack.c.l.b16 %v543
    %v615 = vunpack.c.l.b16 %v544
    %v616 = vunpack.c.l.b16 %v545
    %v617 = vunpack.c.l.b16 %v546
    %v618 = vunpack.c.l.b16 %v547
    %v619 = vunpack.c.l.b16 %v548
    %v620 = vunpack.c.l.b16 %v549
    %v621 = vunpack.c.l.b16 %v550
    %v622 = vunpack.c.l.b16 %v551
    %v623 = vunpack.c.l.b16 %v552
    %v624 = vunpack.c.l.b16 %v553
    %v625 = vunpack.c.l.b16 %v554
    %v626 = vunpack.c.l.b16 %v555
    %v627 = vunpack.c.l.b16 %v556
    %v628 = vunpack.c.l.b16 %v557
    %v629 = vunpack.c.l.b16 %v558
    %v630 = vunpack.c.l.b16 %v559
    %v631 = vunpack.c.l.b16 %v560
    %v632 = vunpack.c.l.b16 %v561
    %v633 = vunpack.c.l.b16 %v562
    %v634 = vunpack.c.l.b16 %v563
    %v635 = vunpack.c.l.b16 %v564
    %v636 = vunpack.c.l.b16 %v565
    %v637 = vunpack.c.l.b16 %v566
    %v638 = vunpack.c.l.b16 %v567
    %v639 = vunpack.c.l.b16 %v568
    %v640 = vpack.c.b16 %v609, %v608
    %v641 = vpack.c.b16 %v611, %v610
    %v642 = vpack.c.b16 %v613, %v612
    %v643 = vpack.c.b16 %v615, %v614
    %v644 = vpack.c.b16 %v617, %v616
    %v645 = vpack.c.b16 %v619, %v618
    %v646 = vpack.c.b16 %v621, %v620
    %v647 = vpack.c.b16 %v623, %v622
    %v648 = vpack.c.b16 %v625, %v624
    %v649 = vpack.c.b16 %v627, %v626
    %v650 = vpack.c.b16 %v629, %v628
    %v651 = vpack.c.b16 %v631, %v630
    %v652 = vpack.c.b16 %v633, %v632
    %v653 = vpack.c.b16 %v635, %v634
    %v654 = vpack.c.b16 %v637, %v636
    %v655 = vpack.c.b16 %v639, %v638
    %672 = vmatprep.subr.bf16.mxu0 0
    %673 = vmatpush1.bf16.msra.mxu0 %v640
    %674 = vmatprep.subr.bf16.mxu0 0
    %675 = vmatpush1.bf16.msra.mxu0 %v641
    %676 = vmatprep.subr.bf16.mxu0 0
    %677 = vmatpush1.bf16.msra.mxu0 %v642
    %678 = vmatprep.subr.bf16.mxu0 0
    %679 = vmatpush1.bf16.msra.mxu0 %v643
    %680 = vmatprep.subr.bf16.mxu0 0
    %681 = vmatpush1.bf16.msra.mxu0 %v644
    %682 = vmatprep.subr.bf16.mxu0 0
    %683 = vmatpush1.bf16.msra.mxu0 %v645
    %684 = vmatprep.subr.bf16.mxu0 0
    %685 = vmatpush1.bf16.msra.mxu0 %v646
    %686 = vmatprep.subr.bf16.mxu0 0
    %687 = vmatpush1.bf16.msra.mxu0 %v647
    %688 = vmatprep.subr.bf16.mxu0 0
    %689 = vmatpush1.bf16.msra.mxu0 %v648
    %690 = vmatprep.subr.bf16.mxu0 0
    %691 = vmatpush1.bf16.msra.mxu0 %v649
    %692 = vmatprep.subr.bf16.mxu0 0
    %693 = vmatpush1.bf16.msra.mxu0 %v650
    %694 = vmatprep.subr.bf16.mxu0 0
    %695 = vmatpush1.bf16.msra.mxu0 %v651
    %696 = vmatprep.subr.bf16.mxu0 0
    %697 = vmatpush1.bf16.msra.mxu0 %v652
    %698 = vmatprep.subr.bf16.mxu0 0
    %699 = vmatpush1.bf16.msra.mxu0 %v653
    %700 = vmatprep.subr.bf16.mxu0 0
    %701 = vmatpush1.bf16.msra.mxu0 %v654
    %702 = vmatprep.subr.bf16.mxu0 0
    %703 = vmatpush1.bf16.msra.mxu0 %v655
    %704 = vmatprep.mubr.bf16.mxu0 %v536
    %705 = vmatmul.mubr.bf16.gmra.mrb[0].mxu0 %v535
    %v706 = vpop.f32.mrb[0].mxu0
    %v707 = vadd.f32 %v574, %v706
    %v708 = vpop.f32.mrb[0].mxu0
    %v709 = vpop.f32.mrb[0].mxu0
    %v710 = vpop.f32.mrb[0].mxu0
    %711 = vdwg.mxu0
    %v712 = vmax.f32 %v707, 0.0
    %v713 = vpack.c.bf16 %v712, %v712
    %v714 = vld [vmem:[%s5] sm:$0xf]
    %v715 = vld [vmem:[%s5 + $0x4] sm:$0xf]
    %v716 = vld [vmem:[%s5 + $0x8] sm:$0xf]
    %v717 = vld [vmem:[%s5 + $0xc] sm:$0xf]
    %v718 = vld [vmem:[%s5 + $0x10] sm:$0xf]
    %v719 = vld [vmem:[%s5 + $0x14] sm:$0xf]
    %v720 = vld [vmem:[%s5 + $0x18] sm:$0xf]
    %v721 = vld [vmem:[%s5 + $0x1c] sm:$0xf]
    %v722 = vld [vmem:[%s5 + $0x20] sm:$0xf]
    %v723 = vld [vmem:[%s5 + $0x24] sm:$0xf]
    %v724 = vld [vmem:[%s5 + $0x28] sm:$0xf]
    %v725 = vld [vmem:[%s5 + $0x2c] sm:$0xf]
    %v726 = vld [vmem:[%s5 + $0x30] sm:$0xf]
    %v727 = vld [vmem:[%s5 + $0x34] sm:$0xf]
    %v728 = vld [vmem:[%s5 + $0x38] sm:$0xf]
    %v729 = vld [vmem:[%s5 + $0x3c] sm:$0xf]
    %v730 = vld [vmem:[%s6] sm:$0x1]
    %v732 = vlaneseq
    %v733 = vshrl.u32 %v732, 7
    %v734 = vsub.s32 0, %v733
    %v735 = vrot.slane %v730, %v734
    %v753 = vunpack.c.l.b16 %v714
    %v754 = vunpack.c.l.b16 %v715
    %v755 = vunpack.c.l.b16 %v716
    %v756 = vunpack.c.l.b16 %v717
    %v757 = vunpack.c.l.b16 %v718
    %v758 = vunpack.c.l.b16 %v719
    %v759 = vunpack.c.l.b16 %v720
    %v760 = vunpack.c.l.b16 %v721
    %v761 = vunpack.c.l.b16 %v722
    %v762 = vunpack.c.l.b16 %v723
    %v763 = vunpack.c.l.b16 %v724
    %v764 = vunpack.c.l.b16 %v725
    %v765 = vunpack.c.l.b16 %v726
    %v766 = vunpack.c.l.b16 %v727
    %v767 = vunpack.c.l.b16 %v728
    %v768 = vunpack.c.l.b16 %v729
    %v769 = vpack.c.b16 %v754, %v753
    %v770 = vpack.c.b16 %v756, %v755
    %v771 = vpack.c.b16 %v758, %v757
    %v772 = vpack.c.b16 %v760, %v759
    %v773 = vpack.c.b16 %v762, %v761
    %v774 = vpack.c.b16 %v764, %v763
    %v775 = vpack.c.b16 %v766, %v765
    %v776 = vpack.c.b16 %v768, %v767
    %785 = vmatprep.subr.bf16.mxu0 0
    %786 = vmatpush1.bf16.msra.mxu0 %v769
    %787 = vmatprep.subr.bf16.mxu0 0
    %788 = vmatpush1.bf16.msra.mxu0 %v770
    %789 = vmatprep.subr.bf16.mxu0 0
    %790 = vmatpush1.bf16.msra.mxu0 %v771
    %791 = vmatprep.subr.bf16.mxu0 0
    %792 = vmatpush1.bf16.msra.mxu0 %v772
    %793 = vmatprep.subr.bf16.mxu0 0
    %794 = vmatpush1.bf16.msra.mxu0 %v773
    %795 = vmatprep.subr.bf16.mxu0 0
    %796 = vmatpush1.bf16.msra.mxu0 %v774
    %797 = vmatprep.subr.bf16.mxu0 0
    %798 = vmatpush1.bf16.msra.mxu0 %v775
    %799 = vmatprep.subr.bf16.mxu0 0
    %800 = vmatpush1.bf16.msra.mxu0 %v776
    %801 = vmatprep.subr.bf16.mxu0 0
    %802 = vmatpush1.bf16.msra.mxu0 0
    %803 = vmatprep.subr.bf16.mxu0 0
    %804 = vmatpush1.bf16.msra.mxu0 0
    %805 = vmatprep.subr.bf16.mxu0 0
    %806 = vmatpush1.bf16.msra.mxu0 0
    %807 = vmatprep.subr.bf16.mxu0 0
    %808 = vmatpush1.bf16.msra.mxu0 0
    %809 = vmatprep.subr.bf16.mxu0 0
    %810 = vmatpush1.bf16.msra.mxu0 0
    %811 = vmatprep.subr.bf16.mxu0 0
    %812 = vmatpush1.bf16.msra.mxu0 0
    %813 = vmatprep.subr.bf16.mxu0 0
    %814 = vmatpush1.bf16.msra.mxu0 0
    %815 = vmatprep.subr.bf16.mxu0 0
    %816 = vmatpush1.bf16.msra.mxu0 0
    %817 = vmatprep.mubr.bf16.mxu0 0
    %818 = vmatmul.mubr.bf16.gmra.mrb[0].mxu0 %v713
    %v819 = vpop.f32.mrb[0].mxu0
    %v820 = vadd.f32 %v735, %v819
    %v821 = vpop.f32.mrb[0].mxu0
    %v822 = vpop.f32.mrb[0].mxu0
    %v823 = vpop.f32.mrb[0].mxu0
    %824 = vdwg.mxu0
    %vm825 = vcmask 25600
    %826 = vst.msk [vmem:[#allocation2] sm:$0x3] %vm825, %v820
    // Predicated region
    $region30: #{nutrition_predictor_forward.1} parent=1 // pred_check
      _
    $region31: #{nutrition_predictor_forward.1} parent=1 // pred_check_branch
      %828 = sbr.rel (0) target = $region33
    $region32: #{nutrition_predictor_forward.1} parent=1 // pred_region
      %s830 = ssub.s32 32, 32
      %831 = vsyncadd [#allocation3], %s830
      %s833 = sshll.u32 [#allocation2], 4
      %s834 = int_to_ptr.vmem [resolvable:$true] %s833
      %836 = dma.vmem_to_hbm [thread:$0]  %s834, 32, %s7, [#allocation3]
    $region33: #{nutrition_predictor_forward.1} parent=1 // pred_fallthru
      _
    // Predicated region
    $region34: #{nutrition_predictor_forward.1} parent=1 // pred_check
      _
    $region35: #{nutrition_predictor_forward.1} parent=1 // pred_check_branch
      %838 = sbr.rel (0) target = $region37
    $region36: #{nutrition_predictor_forward.1} parent=1 // pred_region
      %839 = dma.done [#allocation3], 32
    $region37: #{nutrition_predictor_forward.1} parent=1 // pred_fallthru
      _
    %840 = vsyncpa [#allocation3], 1

</llo_original>
